<compile_context>
chip_gen: v7x
topology: tpu7x:2x2x1
jax: 0.10.0
libtpu: 0.0.40
codegen_flags: <defaults>
</compile_context>

<pallas_src>
import functools

import jax
import jax.numpy as jnp
from jax.experimental import pallas as pl
from jax.experimental.pallas import tpu as pltpu


def _round_up(x, m):
    return ((x + m - 1) // m) * m


def _cdiv(a, b):
    return -(-a // b)


def _mlp_kernel(x_ref, p_ref, o_ref, *, input_dim, hidden, output_dim):
    # x tile arrives in natural (batch_tile, feature) layout straight from HBM.
    # Flip to (feature, batch_tile) on the XLU so every dot / sigmoid is
    # lane-dense (batch on lanes).
    xt = x_ref[...].astype(jnp.float32).T                           # (in, bt)

    # Packed constants: rows 0:h = [W1^T | b1], h:2h = [W2^T | b2 | pad],
    # 2h:2h+out = [W3^T | b3 | pad]; bias sits at column fan_in.
    p = p_ref[...].astype(jnp.float32)
    w1t = p[0:hidden, 0:input_dim]                                  # (h, in)
    b1 = p[0:hidden, input_dim:input_dim + 1]                       # (h, 1)
    w2t = p[hidden:2 * hidden, 0:hidden]                            # (h, h)
    b2 = p[hidden:2 * hidden, hidden:hidden + 1]                    # (h, 1)
    w3t = p[2 * hidden:2 * hidden + output_dim, 0:hidden]           # (out, h)
    b3 = p[2 * hidden:2 * hidden + output_dim, hidden:hidden + 1]   # (out, 1)

    h1 = jax.nn.sigmoid(jnp.dot(w1t, xt, preferred_element_type=jnp.float32) + b1)
    h2 = jax.nn.sigmoid(jnp.dot(w2t, h1, preferred_element_type=jnp.float32) + b2)
    out = jax.nn.sigmoid(jnp.dot(w3t, h2, preferred_element_type=jnp.float32) + b3)

    # Flip back and store the (bt, out) block directly: output written once.
    o_ref[...] = out.T.astype(o_ref.dtype)


@functools.partial(jax.jit, static_argnames=("batch_tile",))
def linear_generator_sigmoid(z, params, *, batch_tile=1024):
    """Pallas forward pass of LinearGeneratorSigmoid.

    z: (B, input_dim) float32
    params: dict with w1 (in,h), b1 (1,h), w2 (h,h), b2 (1,h), w3 (h,out), b3 (1,out)
    (PyTorch semantics: h = sigmoid(x @ W + b) per layer.)
    """
    w1, b1, w2, b2, w3, b3 = (params[k] for k in ("w1", "b1", "w2", "b2", "w3", "b3"))
    B, input_dim = z.shape
    hidden = w1.shape[1]
    output_dim = w3.shape[1]

    # Pack all six (tiny) weight/bias arrays into one constant block.
    cols = max(input_dim, hidden) + 1

    def pack(wt, b):
        blk = jnp.concatenate([wt, b], axis=1)
        return jnp.pad(blk, ((0, 0), (0, cols - blk.shape[1])))

    packed = jnp.concatenate(
        [pack(w1.T, b1.T), pack(w2.T, b2.T), pack(w3.T, b3.T)], axis=0
    ).astype(jnp.float32)                                            # (2h+out, cols)

    # Batch tile: large (amortize per-step overhead), multiple of 128 lanes,
    # capped so the grid has >= 2 steps whenever B allows it (v7x core occupancy).
    two_step_cap = _round_up(_cdiv(B, 2), 128)
    bt = max(128, min(_round_up(batch_tile, 128), two_step_cap))
    grid = (_cdiv(B, bt),)   # partial last block handled by Pallas (masked store)

    cost = pl.CostEstimate(
        flops=2 * B * (input_dim * hidden + hidden * hidden + hidden * output_dim),
        transcendentals=B * (2 * hidden + output_dim),
        bytes_accessed=4 * (B * (input_dim + output_dim) + packed.size),
    )

    kernel = functools.partial(
        _mlp_kernel, input_dim=input_dim, hidden=hidden, output_dim=output_dim
    )

    return pl.pallas_call(
        kernel,
        out_shape=jax.ShapeDtypeStruct((B, output_dim), z.dtype),
        grid_spec=pltpu.PrefetchScalarGridSpec(
            num_scalar_prefetch=0,
            grid=grid,
            in_specs=[
                pl.BlockSpec((bt, input_dim), lambda i: (i, 0)),   # z tile (no pre-transpose)
                pl.BlockSpec(packed.shape, lambda i: (0, 0)),      # packed weights+biases
            ],
            out_specs=pl.BlockSpec((bt, output_dim), lambda i: (i, 0)),
        ),
        compiler_params=pltpu.CompilerParams(
            dimension_semantics=("parallel",),
        ),
        cost_estimate=cost,
    )(z, packed)


def init_params(key, input_dim, output_dim, hidden_size=5, dtype=jnp.float32):
    """Deterministic init mimicking PyTorch nn.Linear default: U(-1/sqrt(fan_in), 1/sqrt(fan_in))."""
    keys = jax.random.split(key, 6)

    def linear(kw, kb, fan_in, fan_out):
        bound = 1.0 / jnp.sqrt(jnp.asarray(fan_in, dtype))
        w = jax.random.uniform(kw, (fan_in, fan_out), dtype, -bound, bound)
        b = jax.random.uniform(kb, (1, fan_out), dtype, -bound, bound)
        return w, b

    w1, b1 = linear(keys[0], keys[1], input_dim, hidden_size)
    w2, b2 = linear(keys[2], keys[3], hidden_size, hidden_size)
    w3, b3 = linear(keys[4], keys[5], hidden_size, output_dim)
    return {"w1": w1, "b1": b1, "w2": w2, "b2": b2, "w3": w3, "b3": b3}


def reference_forward(z, params):
    h1 = jax.nn.sigmoid(z @ params["w1"] + params["b1"])
    h2 = jax.nn.sigmoid(h1 @ params["w2"] + params["b2"])
    return jax.nn.sigmoid(h2 @ params["w3"] + params["b3"])


if __name__ == "__main__":
    key = jax.random.PRNGKey(0)
    k_z, k_p = jax.random.split(key)

    # batch=512 -> bt=256, grid=(2,) "parallel" steps (both TCs busy on v7x),
    # lane-dense 256-wide compute tiles, output stored once as (256,16) blocks.
    batch, input_dim, hidden_size, output_dim = 512, 32, 5, 16
    z = jax.random.normal(k_z, (batch, input_dim), dtype=jnp.float32)
    params = init_params(k_p, input_dim, output_dim, hidden_size)

    out = linear_generator_sigmoid(z, params)
    out = jax.block_until_ready(out)

    ref = reference_forward(z, params)
    assert out.shape == (batch, output_dim)
    assert jnp.allclose(out, ref, atol=2e-5, rtol=1e-5), "mismatch vs pure-JAX reference"

    print("KERNEL_OK")
</pallas_src>

<mosaic_0001>
module attributes {stable_mosaic.version = 11 : i64} {
  func.func @_mlp_kernel(%arg0: i32, %arg1: memref<256x32xf32, #tpu.memory_space<vmem>>, %arg2: memref<26x33xf32, #tpu.memory_space<vmem>>, %arg3: memref<256x16xf32, #tpu.memory_space<vmem>>) attributes {dimension_semantics = [#tpu.dimension_semantics<parallel>], iteration_bounds = array<i64: 2>, scalar_prefetch = 0 : i64, scratch_operands = 0 : i64, tpu.core_type = #tpu.core_type<tc>, window_params = [{transform_indices = @transform_0, window_bounds = array<i64: 256, 32>}, {pipeline_mode = #tpu.pipeline_mode<synchronous>, transform_indices = @transform_1, window_bounds = array<i64: 26, 33>}, {transform_indices = @transform_2, window_bounds = array<i64: 256, 16>}]} {
    %c0 = arith.constant 0 : index
    %c0_0 = arith.constant 0 : index
    %0 = vector.load %arg1[%c0, %c0_0] : memref<256x32xf32, #tpu.memory_space<vmem>>, vector<256x32xf32>
    %1 = tpu.transpose %0, [1, 0] : vector<256x32xf32> -> vector<32x256xf32>
    %c0_1 = arith.constant 0 : index
    %c0_2 = arith.constant 0 : index
    %2 = vector.load %arg2[%c0_1, %c0_2] : memref<26x33xf32, #tpu.memory_space<vmem>>, vector<26x33xf32>
    %3 = vector.extract_strided_slice %2 {offsets = [0, 0], sizes = [5, 32], strides = [1, 1]} : vector<26x33xf32> to vector<5x32xf32>
    %4 = vector.extract_strided_slice %2 {offsets = [0, 32], sizes = [5, 1], strides = [1, 1]} : vector<26x33xf32> to vector<5x1xf32>
    %5 = vector.extract_strided_slice %2 {offsets = [5, 0], sizes = [5, 5], strides = [1, 1]} : vector<26x33xf32> to vector<5x5xf32>
    %6 = vector.extract_strided_slice %2 {offsets = [5, 5], sizes = [5, 1], strides = [1, 1]} : vector<26x33xf32> to vector<5x1xf32>
    %7 = vector.extract_strided_slice %2 {offsets = [10, 0], sizes = [16, 5], strides = [1, 1]} : vector<26x33xf32> to vector<16x5xf32>
    %8 = vector.extract_strided_slice %2 {offsets = [10, 5], sizes = [16, 1], strides = [1, 1]} : vector<26x33xf32> to vector<16x1xf32>
    %cst = arith.constant dense<0.000000e+00> : vector<5x256xf32>
    %9 = tpu.matmul %3, %1, %cst {dimension_numbers = #tpu.dot_dimension_numbers<[1], [0], [0], [1], [0, 0, 1, 1], [], []>} : vector<5x32xf32>, vector<32x256xf32>, vector<5x256xf32> -> vector<5x256xf32>
    %10 = vector.broadcast %4 : vector<5x1xf32> to vector<5x256xf32>
    %11 = arith.addf %9, %10 : vector<5x256xf32>
    %12 = arith.negf %11 : vector<5x256xf32>
    %13 = math.exp %12 : vector<5x256xf32>
    %cst_3 = arith.constant 1.000000e+00 : f32
    %14 = vector.broadcast %cst_3 : f32 to vector<5x256xf32>
    %15 = arith.addf %14, %13 : vector<5x256xf32>
    %16 = arith.divf %14, %15 : vector<5x256xf32>
    %cst_4 = arith.constant dense<0.000000e+00> : vector<5x256xf32>
    %17 = tpu.matmul %5, %16, %cst_4 {dimension_numbers = #tpu.dot_dimension_numbers<[1], [0], [0], [1], [0, 0, 1, 1], [], []>} : vector<5x5xf32>, vector<5x256xf32>, vector<5x256xf32> -> vector<5x256xf32>
    %18 = vector.broadcast %6 : vector<5x1xf32> to vector<5x256xf32>
    %19 = arith.addf %17, %18 : vector<5x256xf32>
    %20 = arith.negf %19 : vector<5x256xf32>
    %21 = math.exp %20 : vector<5x256xf32>
    %cst_5 = arith.constant 1.000000e+00 : f32
    %22 = vector.broadcast %cst_5 : f32 to vector<5x256xf32>
    %23 = arith.addf %22, %21 : vector<5x256xf32>
    %24 = arith.divf %22, %23 : vector<5x256xf32>
    %cst_6 = arith.constant dense<0.000000e+00> : vector<16x256xf32>
    %25 = tpu.matmul %7, %24, %cst_6 {dimension_numbers = #tpu.dot_dimension_numbers<[1], [0], [0], [1], [0, 0, 1, 1], [], []>} : vector<16x5xf32>, vector<5x256xf32>, vector<16x256xf32> -> vector<16x256xf32>
    %26 = vector.broadcast %8 : vector<16x1xf32> to vector<16x256xf32>
    %27 = arith.addf %25, %26 : vector<16x256xf32>
    %28 = arith.negf %27 : vector<16x256xf32>
    %29 = math.exp %28 : vector<16x256xf32>
    %cst_7 = arith.constant 1.000000e+00 : f32
    %30 = vector.broadcast %cst_7 : f32 to vector<16x256xf32>
    %31 = arith.addf %30, %29 : vector<16x256xf32>
    %32 = arith.divf %30, %31 : vector<16x256xf32>
    %33 = tpu.transpose %32, [1, 0] : vector<16x256xf32> -> vector<256x16xf32>
    %c0_8 = arith.constant 0 : index
    %c0_9 = arith.constant 0 : index
    %34 = vector.load %arg3[%c0_8, %c0_9] : memref<256x16xf32, #tpu.memory_space<vmem>>, vector<256x16xf32>
    tpu.vector_store %arg3[%c0_8, %c0_9], %33 {strides = array<i32>} : memref<256x16xf32, #tpu.memory_space<vmem>>, vector<256x16xf32>,
    return
  }
  func.func @transform_0(%arg0: i32) -> (i32, i32) {
    %c0_i32 = arith.constant 0 : i32
    %c0_i32_0 = arith.constant 0 : i32
    return %arg0, %c0_i32 : i32, i32
  }
  func.func @transform_1(%arg0: i32) -> (i32, i32) {
    %c0_i32 = arith.constant 0 : i32
    %c0_i32_0 = arith.constant 0 : i32
    %c0_i32_1 = arith.constant 0 : i32
    return %c0_i32, %c0_i32_0 : i32, i32
  }
  func.func @transform_2(%arg0: i32) -> (i32, i32) {
    %c0_i32 = arith.constant 0 : i32
    %c0_i32_0 = arith.constant 0 : i32
    return %arg0, %c0_i32 : i32, i32
  }
}

</mosaic_0001>

<llo_original>
// kernel: linear_generator_sigmoid.1
$region0: #{linear_generator_sigmoid.1}
  #allocation0 [shape = 'u32[]', space=smem, size = 0x4, offset = 0x4, fixed_abs, tag = 'smem constant byte address 0x4 - core index']
  #allocation1 [shape = 'u32[144,128]{1,0:T(1,128)}', space=vmem, size = 0x12000, scoped, tag = 'internal scratch']
  %s0 = inlined_call_operand.vmem [shape: f32[512,32], index: 0, kind: input, shape index: {}]
  %s1 = inlined_call_operand.vmem [shape: f32[26,33], index: 1, kind: input, shape index: {}]
  %s2 = inlined_call_operand.vmem [shape: f32[512,16], index: 2, kind: output, shape index: {}]
  %s3 = sld [smem:[#allocation0]]
  $region41: #{linear_generator_sigmoid.1} parent=0
    _
  %s5 = ssub.s32 1, %s3
  %s6 = scalar_select 0, %s5, %s3
  loop: start=0, step=1, limit=4
  $region2: #{linear_generator_sigmoid.1} parent=0 // loop_pre_header
    _
  $region3: #{linear_generator_sigmoid.1} parent=0 // loop_header
    %s8 = sphi 0, %s12
    %p9 = scmp.ge.s32.totalorder %s8, 4
    %s18 = sphi 0, %s20
    %s21 = sphi 0, %s18
    %s22 = sphi 0, %s21
    %s38 = sphi 0, %s22
    %s42 = sphi 0, %s42
    %s44 = sphi 0, %s42
    %s45 = sphi 0, %s44
    %s59 = sphi 0, %s45
    %s65 = sphi 0, %s67
    %s68 = sphi 0, %s65
    %s69 = sphi 0, %s68
    %s85 = sphi 0, %s69
  $region4: #{linear_generator_sigmoid.1} parent=0 // loop_header_branch
    %11 = sbr.rel (%p9) target = $region8
  $region5: #{linear_generator_sigmoid.1} parent=0 // loop_body
    %s13 = ssub.s32 %s8, 1
    %s14 = ssub.s32 %s8, 2
    %s15 = sadd.s32 %s8, 1
    %s16 = ssub.s32 %s8, %s15
    %p17 = scmp.eq.s32.totalorder %s16, 0
    %s19 = sadd.s32 %s18, 1
    %s20 = scalar_select %p17, %s18, %s19
    %p23 = pneg %p17
    %p24 = scmp.eq.s32.totalorder %s8, 1
    %p25 = por %p23, %p24
    %p26 = scmp.ne.s32.totalorder %s18, %s21
    %p27 = scmp.eq.s32.totalorder %s8, 0
    %p28 = por %p26, %p27
    %p29 = scmp.ne.s32.totalorder %s18, %s21
    %p30 = scmp.eq.s32.totalorder %s13, 1
    %p31 = por %p29, %p30
    %p32 = scmp.ne.s32.totalorder %s21, %s22
    %p33 = scmp.eq.s32.totalorder %s13, 0
    %p34 = por %p32, %p33
    %p35 = scmp.ne.s32.totalorder %s21, %s22
    %p36 = scmp.eq.s32.totalorder %s14, 1
    %p37 = por %p35, %p36
    %p39 = scmp.ne.s32.totalorder %s22, %s38
    %p40 = scmp.eq.s32.totalorder %s14, 0
    %p41 = por %p39, %p40
    %s43 = sadd.s32 %s42, 1
    %p46 = scmp.eq.s32.totalorder %s8, 1
    %p47 = scmp.ne.s32.totalorder %s42, %s44
    %p48 = scmp.eq.s32.totalorder %s8, 0
    %p49 = por %p47, %p48
    %p50 = scmp.ne.s32.totalorder %s42, %s44
    %p51 = scmp.eq.s32.totalorder %s13, 1
    %p52 = por %p50, %p51
    %p53 = scmp.ne.s32.totalorder %s44, %s45
    %p54 = scmp.eq.s32.totalorder %s13, 0
    %p55 = por %p53, %p54
    %p56 = scmp.ne.s32.totalorder %s44, %s45
    %p57 = scmp.eq.s32.totalorder %s14, 1
    %p58 = por %p56, %p57
    %p60 = scmp.ne.s32.totalorder %s45, %s59
    %p61 = scmp.eq.s32.totalorder %s14, 0
    %p62 = por %p60, %p61
    %s63 = ssub.s32 %s8, %s15
    %p64 = scmp.eq.s32.totalorder %s63, 0
    %s66 = sadd.s32 %s65, 1
    %s67 = scalar_select %p64, %s65, %s66
    %p70 = pneg %p64
    %p71 = scmp.eq.s32.totalorder %s8, 1
    %p72 = por %p70, %p71
    %p73 = scmp.ne.s32.totalorder %s65, %s68
    %p74 = scmp.eq.s32.totalorder %s8, 0
    %p75 = por %p73, %p74
    %p76 = scmp.ne.s32.totalorder %s65, %s68
    %p77 = scmp.eq.s32.totalorder %s13, 1
    %p78 = por %p76, %p77
    %p79 = scmp.ne.s32.totalorder %s68, %s69
    %p80 = scmp.eq.s32.totalorder %s13, 0
    %p81 = por %p79, %p80
    %p82 = scmp.ne.s32.totalorder %s68, %s69
    %p83 = scmp.eq.s32.totalorder %s14, 1
    %p84 = por %p82, %p83
    %p86 = scmp.ne.s32.totalorder %s69, %s85
    %p87 = scmp.eq.s32.totalorder %s14, 0
    %p88 = por %p86, %p87
    %p89 = scmp.le.s32.totalorder 1, %s8
    %p90 = scmp.lt.s32.totalorder %s8, 3
    %p91 = pnand %p89, %p90
    %p92 = pneg %p91
    // Predicated region
    $region9: #{linear_generator_sigmoid.1} parent=5 // pred_check
      _
    $region10: #{linear_generator_sigmoid.1} parent=5 // pred_check_branch
      %94 = sbr.rel (%p91) target = $region12
    $region11: #{linear_generator_sigmoid.1} parent=5 // pred_region
      %s95 = ssub.s32 %s8, 1
      // Predicated region
      $region13: #{linear_generator_sigmoid.1} parent=11 // pred_check
        %p96 = pneg %p55
      $region14: #{linear_generator_sigmoid.1} parent=11 // pred_check_branch
        %98 = sbr.rel (%p96) target = $region16
      $region15: #{linear_generator_sigmoid.1} parent=11 // pred_region
        _
      $region16: #{linear_generator_sigmoid.1} parent=11 // pred_fallthru
        _
    $region12: #{linear_generator_sigmoid.1} parent=5 // pred_fallthru
      _
    %p99 = scmp.lt.s32.totalorder %s8, 2
    // Predicated region
    $region17: #{linear_generator_sigmoid.1} parent=5 // pred_check
      %p100 = pneg %p99
    $region18: #{linear_generator_sigmoid.1} parent=5 // pred_check_branch
      %102 = sbr.rel (%p100) target = $region20
    $region19: #{linear_generator_sigmoid.1} parent=5 // pred_region
      // Predicated region
      $region21: #{linear_generator_sigmoid.1} parent=19 // pred_check
        %p103 = pneg %p28
      $region22: #{linear_generator_sigmoid.1} parent=19 // pred_check_branch
        %105 = sbr.rel (%p103) target = $region24
      $region23: #{linear_generator_sigmoid.1} parent=19 // pred_region
        %s106 = smul.u32 32, %s8
        %p107 = scmp.lt.s32.totalorder %s106, 63
        %s108 = scalar_select %p107, %s106, 63
        %s109 = smul.addr %s108, 8
        %s110 = scalar_lea.vmem %s0, %s109
        %s111 = smul.u32 32, %s8
      $region24: #{linear_generator_sigmoid.1} parent=19 // pred_fallthru
        _
    $region20: #{linear_generator_sigmoid.1} parent=5 // pred_fallthru
      _
    %p112 = scmp.le.s32.totalorder 1, %s8
    %p113 = scmp.lt.s32.totalorder %s8, 3
    %p114 = pnand %p112, %p113
    %p115 = pneg %p114
    // Predicated region
    $region25: #{linear_generator_sigmoid.1} parent=5 // pred_check
      _
    $region26: #{linear_generator_sigmoid.1} parent=5 // pred_check_branch
      %117 = sbr.rel (%p114) target = $region28
    $region27: #{linear_generator_sigmoid.1} parent=5 // pred_region
      %s118 = ssub.s32 %s8, 1
      %s119 = smul.u32 32, %s13
      %p120 = scmp.lt.s32.totalorder %s119, 63
      %s121 = scalar_select %p120, %s119, 63
      %s122 = smul.addr %s121, 8
      %s123 = scalar_lea.vmem %s0, %s122
      %p124 = pneg %p34
      %p125 = pneg %p31
      %p126 = pneg %p55
      %p127 = pneg %p52
      %p128 = pneg %p81
      %p129 = pneg %p78
      %s130 = smul.u32 32, %s13
      %p131 = scmp.lt.s32.totalorder %s130, 63
      %s132 = scalar_select %p131, %s130, 63
      %s133 = smul.addr %s132, 8
      %s134 = scalar_lea.vmem %s2, %s133
      %s135 = smul.u32 32, %s13
      %p136 = scmp.lt.s32.totalorder %s135, 63
      %s137 = scalar_select %p136, %s135, 63
      %s138 = smul.addr %s137, 8
      %s139 = scalar_lea.vmem %s0, %s138
      %s140 = smul.u32 32, %s13
      %s141 = smul.u32 32, %s13
      %p142 = scmp.lt.s32.totalorder %s141, 63
      %s143 = scalar_select %p142, %s141, 63
      %s144 = smul.addr %s143, 8
      %s145 = scalar_lea.vmem %s2, %s144
      %s146 = smul.u32 32, %s13
      %v147 = vld [vmem:[%s139] sm:$0xff]
      %v148 = vld [vmem:[%s139 + $0x8] sm:$0xff]
      %v149 = vld [vmem:[%s139 + $0x10] sm:$0xff]
      %v150 = vld [vmem:[%s139 + $0x18] sm:$0xff]
      %v151 = vld [vmem:[%s139 + $0x20] sm:$0xff]
      %v152 = vld [vmem:[%s139 + $0x28] sm:$0xff]
      %v153 = vld [vmem:[%s139 + $0x30] sm:$0xff]
      %v154 = vld [vmem:[%s139 + $0x38] sm:$0xff]
      %v155 = vld [vmem:[%s139 + $0x40] sm:$0xff]
      %v156 = vld [vmem:[%s139 + $0x48] sm:$0xff]
      %v157 = vld [vmem:[%s139 + $0x50] sm:$0xff]
      %v158 = vld [vmem:[%s139 + $0x58] sm:$0xff]
      %v159 = vld [vmem:[%s139 + $0x60] sm:$0xff]
      %v160 = vld [vmem:[%s139 + $0x68] sm:$0xff]
      %v161 = vld [vmem:[%s139 + $0x70] sm:$0xff]
      %v162 = vld [vmem:[%s139 + $0x78] sm:$0xff]
      %v163 = vld [vmem:[%s139 + $0x80] sm:$0xff]
      %v164 = vld [vmem:[%s139 + $0x88] sm:$0xff]
      %v165 = vld [vmem:[%s139 + $0x90] sm:$0xff]
      %v166 = vld [vmem:[%s139 + $0x98] sm:$0xff]
      %v167 = vld [vmem:[%s139 + $0xa0] sm:$0xff]
      %v168 = vld [vmem:[%s139 + $0xa8] sm:$0xff]
      %v169 = vld [vmem:[%s139 + $0xb0] sm:$0xff]
      %v170 = vld [vmem:[%s139 + $0xb8] sm:$0xff]
      %v171 = vld [vmem:[%s139 + $0xc0] sm:$0xff]
      %v172 = vld [vmem:[%s139 + $0xc8] sm:$0xff]
      %v173 = vld [vmem:[%s139 + $0xd0] sm:$0xff]
      %v174 = vld [vmem:[%s139 + $0xd8] sm:$0xff]
      %v175 = vld [vmem:[%s139 + $0xe0] sm:$0xff]
      %v176 = vld [vmem:[%s139 + $0xe8] sm:$0xff]
      %v177 = vld [vmem:[%s139 + $0xf0] sm:$0xff]
      %v178 = vld [vmem:[%s139 + $0xf8] sm:$0xff]
      %v179 = vld [vmem:[%s1] sm:$0xff]
      %v180 = vld [vmem:[%s1 + $0x8] sm:$0xff]
      %v181 = vld [vmem:[%s1 + $0x10] sm:$0xff]
      %v182 = vld [vmem:[%s1 + $0x18] sm:$0x3]
      %184 = vset.pattern.permute.xlu0 32
      %185 = vperm.xlu0 %184, %v179
      %v186 = vpop.permute.xlu0 %185
      %vm188 = vcmask 261120
      %v189 = vsel %vm188, %v179, 0
      %v192 = vsel %vm188, %v147, 0
      %v195 = vsel %vm188, %v148, 0
      %v198 = vsel %vm188, %v149, 0
      %v201 = vsel %vm188, %v150, 0
      %v204 = vsel %vm188, %v151, 0
      %v207 = vsel %vm188, %v152, 0
      %v210 = vsel %vm188, %v153, 0
      %v213 = vsel %vm188, %v154, 0
      %v216 = vsel %vm188, %v155, 0
      %v219 = vsel %vm188, %v156, 0
      %v222 = vsel %vm188, %v157, 0
      %v225 = vsel %vm188, %v158, 0
      %v228 = vsel %vm188, %v159, 0
      %v231 = vsel %vm188, %v160, 0
      %v234 = vsel %vm188, %v161, 0
      %v237 = vsel %vm188, %v162, 0
      %v240 = vsel %vm188, %v163, 0
      %v243 = vsel %vm188, %v164, 0
      %v246 = vsel %vm188, %v165, 0
      %v249 = vsel %vm188, %v166, 0
      %v252 = vsel %vm188, %v167, 0
      %v255 = vsel %vm188, %v168, 0
      %v258 = vsel %vm188, %v169, 0
      %v261 = vsel %vm188, %v170, 0
      %v264 = vsel %vm188, %v171, 0
      %v267 = vsel %vm188, %v172, 0
      %v270 = vsel %vm188, %v173, 0
      %v273 = vsel %vm188, %v174, 0
      %v276 = vsel %vm188, %v175, 0
      %v279 = vsel %vm188, %v176, 0
      %v282 = vsel %vm188, %v177, 0
      %v285 = vsel %vm188, %v178, 0
      %287 = vmatprep.subr.mxu0 0.0
      %288 = vmatpush1.xpose.msra.mxu0 %v192
      %289 = vmatprep.subr.mxu0 0.0
      %290 = vmatpush1.xpose.msra.mxu0 %v195
      %291 = vmatprep.subr.mxu0 0.0
      %292 = vmatpush1.xpose.msra.mxu0 %v198
      %293 = vmatprep.subr.mxu0 0.0
      %294 = vmatpush1.xpose.msra.mxu0 %v201
      %295 = vmatprep.subr.mxu0 0.0
      %296 = vmatpush1.xpose.msra.mxu0 %v204
      %297 = vmatprep.subr.mxu0 0.0
      %298 = vmatpush1.xpose.msra.mxu0 %v207
      %299 = vmatprep.subr.mxu0 0.0
      %300 = vmatpush1.xpose.msra.mxu0 %v210
      %301 = vmatprep.subr.mxu0 0.0
      %302 = vmatpush1.xpose.msra.mxu0 %v213
      %303 = vmatprep.subr.mxu0 0.0
      %304 = vmatpush1.xpose.msra.mxu0 %v216
      %305 = vmatprep.subr.mxu0 0.0
      %306 = vmatpush1.xpose.msra.mxu0 %v219
      %307 = vmatprep.subr.mxu0 0.0
      %308 = vmatpush1.xpose.msra.mxu0 %v222
      %309 = vmatprep.subr.mxu0 0.0
      %310 = vmatpush1.xpose.msra.mxu0 %v225
      %311 = vmatprep.subr.mxu0 0.0
      %312 = vmatpush1.xpose.msra.mxu0 %v228
      %313 = vmatprep.subr.mxu0 0.0
      %314 = vmatpush1.xpose.msra.mxu0 %v231
      %315 = vmatprep.subr.mxu0 0.0
      %316 = vmatpush1.xpose.msra.mxu0 %v234
      %317 = vmatprep.subr.mxu0 0.0
      %318 = vmatpush1.xpose.msra.mxu0 %v237
      %319 = vmatprep.subr.mxu0 0.0
      %320 = vmatpush1.xpose.msra.mxu0 %v240
      %321 = vmatprep.subr.mxu0 0.0
      %322 = vmatpush1.xpose.msra.mxu0 %v243
      %323 = vmatprep.subr.mxu0 0.0
      %324 = vmatpush1.xpose.msra.mxu0 %v246
      %325 = vmatprep.subr.mxu0 0.0
      %326 = vmatpush1.xpose.msra.mxu0 %v249
      %327 = vmatprep.subr.mxu0 0.0
      %328 = vmatpush1.xpose.msra.mxu0 %v252
      %329 = vmatprep.subr.mxu0 0.0
      %330 = vmatpush1.xpose.msra.mxu0 %v255
      %331 = vmatprep.subr.mxu0 0.0
      %332 = vmatpush1.xpose.msra.mxu0 %v258
      %333 = vmatprep.subr.mxu0 0.0
      %334 = vmatpush1.xpose.msra.mxu0 %v261
      %335 = vmatprep.subr.mxu0 0.0
      %336 = vmatpush1.xpose.msra.mxu0 %v264
      %337 = vmatprep.subr.mxu0 0.0
      %338 = vmatpush1.xpose.msra.mxu0 %v267
      %339 = vmatprep.subr.mxu0 0.0
      %340 = vmatpush1.xpose.msra.mxu0 %v270
      %341 = vmatprep.subr.mxu0 0.0
      %342 = vmatpush1.xpose.msra.mxu0 %v273
      %343 = vmatprep.subr.mxu0 0.0
      %344 = vmatpush1.xpose.msra.mxu0 %v276
      %345 = vmatprep.subr.mxu0 0.0
      %346 = vmatpush1.xpose.msra.mxu0 %v279
      %347 = vmatprep.subr.mxu0 0.0
      %348 = vmatpush1.xpose.msra.mxu0 %v282
      %349 = vmatprep.subr.mxu0 0.0
      %350 = vmatpush1.xpose.msra.mxu0 %v285
      %351 = vmatprep.mubr.f32.mxu0 0.0
      %352 = vmatmul.mubr.f32.gmra.mrb[0].mxu0 %v189
      %v353 = vpop.f32.mrb[0].mxu0
      %v354 = vadd.f32 %v186, %v353
      %v355 = vpop.f32.mrb[0].mxu0
      %v356 = vadd.f32 %v186, %v355
      %357 = vdwg.mxu0
      %v358 = vxor.u32 %v354, 2147483648
      %v359 = vxor.u32 %v356, 2147483648
      %v360 = vmul.f32 %v358, 1.442695
      %v361 = vpow.pop %v360
      %v362 = vmul.f32 %v359, 1.442695
      %v363 = vpow.pop %v362
      %v364 = vadd.f32 %v361, 1.0
      %v365 = vadd.f32 %v363, 1.0
      %v366 = vrcp.pop %v364
      %v367 = vmul.f32 1.0, %v366
      %v368 = vrcp.pop %v365
      %v369 = vmul.f32 1.0, %v368
      %370 = vset.pattern.permute.xlu0 5
      %371 = vperm.xlu0 %370, %v179
      %v372 = vpop.permute.xlu0 %371
      %374 = vset.pattern.permute.xlu0 5
      %375 = vperm.xlu0 %374, %v180
      %v376 = vpop.permute.xlu0 %375
      %vm377 = vcmask 1042432
      %v378 = vrot.slane %v179, 5
      %v379 = vrot.slane %v180, 5
      %v380 = vsel %vm377, %v378, %v379
      %v381 = vrot.slane %v372, 5
      %v382 = vrot.slane %v376, 5
      %v383 = vsel %vm377, %v381, %v382
      %vm385 = vcmask 39936
      %v386 = vsel %vm385, %v380, 0
      %vm388 = vcmask 1044480
      %v390 = vsel %vm388, %v367, 0
      %v393 = vsel %vm388, %v369, 0
      %395 = vmatprep.subr.mxu0 %v393
      %396 = vmatpush1.msra.mxu0 %v390
      %397 = vmatprep.subr.mxu0 0.0
      %398 = vmatpush1.msra.mxu0 0.0
      %399 = vmatprep.subr.mxu0 0.0
      %400 = vmatpush1.msra.mxu0 0.0
      %401 = vmatprep.subr.mxu0 0.0
      %402 = vmatpush1.msra.mxu0 0.0
      %403 = vmatprep.subr.mxu0 0.0
      %404 = vmatpush1.msra.mxu0 0.0
      %405 = vmatprep.subr.mxu0 0.0
      %406 = vmatpush1.msra.mxu0 0.0
      %407 = vmatprep.subr.mxu0 0.0
      %408 = vmatpush1.msra.mxu0 0.0
      %409 = vmatprep.subr.mxu0 0.0
      %410 = vmatpush1.msra.mxu0 0.0
      %411 = vmatprep.subr.mxu0 0.0
      %412 = vmatpush1.msra.mxu0 0.0
      %413 = vmatprep.subr.mxu0 0.0
      %414 = vmatpush1.msra.mxu0 0.0
      %415 = vmatprep.subr.mxu0 0.0
      %416 = vmatpush1.msra.mxu0 0.0
      %417 = vmatprep.subr.mxu0 0.0
      %418 = vmatpush1.msra.mxu0 0.0
      %419 = vmatprep.subr.mxu0 0.0
      %420 = vmatpush1.msra.mxu0 0.0
      %421 = vmatprep.subr.mxu0 0.0
      %422 = vmatpush1.msra.mxu0 0.0
      %423 = vmatprep.subr.mxu0 0.0
      %424 = vmatpush1.msra.mxu0 0.0
      %425 = vmatprep.subr.mxu0 0.0
      %426 = vmatpush1.msra.mxu0 0.0
      %427 = vmatprep.subr.mxu0 0.0
      %428 = vmatpush1.msra.mxu0 0.0
      %429 = vmatprep.subr.mxu0 0.0
      %430 = vmatpush1.msra.mxu0 0.0
      %431 = vmatprep.subr.mxu0 0.0
      %432 = vmatpush1.msra.mxu0 0.0
      %433 = vmatprep.subr.mxu0 0.0
      %434 = vmatpush1.msra.mxu0 0.0
      %435 = vmatprep.subr.mxu0 0.0
      %436 = vmatpush1.msra.mxu0 0.0
      %437 = vmatprep.subr.mxu0 0.0
      %438 = vmatpush1.msra.mxu0 0.0
      %439 = vmatprep.subr.mxu0 0.0
      %440 = vmatpush1.msra.mxu0 0.0
      %441 = vmatprep.subr.mxu0 0.0
      %442 = vmatpush1.msra.mxu0 0.0
      %443 = vmatprep.subr.mxu0 0.0
      %444 = vmatpush1.msra.mxu0 0.0
      %445 = vmatprep.subr.mxu0 0.0
      %446 = vmatpush1.msra.mxu0 0.0
      %447 = vmatprep.subr.mxu0 0.0
      %448 = vmatpush1.msra.mxu0 0.0
      %449 = vmatprep.subr.mxu0 0.0
      %450 = vmatpush1.msra.mxu0 0.0
      %451 = vmatprep.subr.mxu0 0.0
      %452 = vmatpush1.msra.mxu0 0.0
      %453 = vmatprep.subr.mxu0 0.0
      %454 = vmatpush1.msra.mxu0 0.0
      %455 = vmatprep.subr.mxu0 0.0
      %456 = vmatpush1.msra.mxu0 0.0
      %457 = vmatprep.subr.mxu0 0.0
      %458 = vmatpush1.msra.mxu0 0.0
      %459 = vmatprep.mubr.f32.mxu0 0.0
      %460 = vmatmul.mubr.f32.gmra.mrb[0].mxu0 %v386
      %v461 = vpop.f32.mrb[0].mxu0
      %v462 = vadd.f32 %v383, %v461
      %v463 = vpop.f32.mrb[0].mxu0
      %v464 = vadd.f32 %v383, %v463
      %465 = vdwg.mxu0
      %v466 = vxor.u32 %v462, 2147483648
      %v467 = vxor.u32 %v464, 2147483648
      %v468 = vmul.f32 %v466, 1.442695
      %v469 = vpow.pop %v468
      %v470 = vmul.f32 %v467, 1.442695
      %v471 = vpow.pop %v470
      %v472 = vadd.f32 %v469, 1.0
      %v473 = vadd.f32 %v471, 1.0
      %v474 = vrcp.pop %v472
      %v475 = vmul.f32 1.0, %v474
      %v476 = vrcp.pop %v473
      %v477 = vmul.f32 1.0, %v476
      %479 = vset.pattern.permute.xlu0 5
      %480 = vperm.xlu0 %479, %v181
      %v481 = vpop.permute.xlu0 %480
      %483 = vset.pattern.permute.xlu0 5
      %484 = vperm.xlu0 %483, %v182
      %v485 = vpop.permute.xlu0 %484
      %vm486 = vcmask 1045504
      %v487 = vrot.slane %v180, 2
      %v488 = vrot.slane %v181, 2
      %v489 = vsel %vm486, %v487, %v488
      %v490 = vrot.slane %v182, 2
      %v491 = vsel %vm486, %v488, %v490
      %v492 = vrot.slane %v376, 2
      %v493 = vrot.slane %v481, 2
      %v494 = vsel %vm486, %v492, %v493
      %v495 = vrot.slane %v485, 2
      %v496 = vsel %vm486, %v493, %v495
      %v499 = vsel %vm385, %v489, 0
      %v501 = vsel %vm385, %v491, 0
      %v504 = vsel %vm388, %v475, 0
      %v507 = vsel %vm388, %v477, 0
      %509 = vmatprep.subr.mxu0 %v507
      %510 = vmatpush1.msra.mxu0 %v504
      %511 = vmatprep.subr.mxu0 0.0
      %512 = vmatpush1.msra.mxu0 0.0
      %513 = vmatprep.subr.mxu0 0.0
      %514 = vmatpush1.msra.mxu0 0.0
      %515 = vmatprep.subr.mxu0 0.0
      %516 = vmatpush1.msra.mxu0 0.0
      %517 = vmatprep.subr.mxu0 0.0
      %518 = vmatpush1.msra.mxu0 0.0
      %519 = vmatprep.subr.mxu0 0.0
      %520 = vmatpush1.msra.mxu0 0.0
      %521 = vmatprep.subr.mxu0 0.0
      %522 = vmatpush1.msra.mxu0 0.0
      %523 = vmatprep.subr.mxu0 0.0
      %524 = vmatpush1.msra.mxu0 0.0
      %525 = vmatprep.subr.mxu0 0.0
      %526 = vmatpush1.msra.mxu0 0.0
      %527 = vmatprep.subr.mxu0 0.0
      %528 = vmatpush1.msra.mxu0 0.0
      %529 = vmatprep.subr.mxu0 0.0
      %530 = vmatpush1.msra.mxu0 0.0
      %531 = vmatprep.subr.mxu0 0.0
      %532 = vmatpush1.msra.mxu0 0.0
      %533 = vmatprep.subr.mxu0 0.0
      %534 = vmatpush1.msra.mxu0 0.0
      %535 = vmatprep.subr.mxu0 0.0
      %536 = vmatpush1.msra.mxu0 0.0
      %537 = vmatprep.subr.mxu0 0.0
      %538 = vmatpush1.msra.mxu0 0.0
      %539 = vmatprep.subr.mxu0 0.0
      %540 = vmatpush1.msra.mxu0 0.0
      %541 = vmatprep.subr.mxu0 0.0
      %542 = vmatpush1.msra.mxu0 0.0
      %543 = vmatprep.subr.mxu0 0.0
      %544 = vmatpush1.msra.mxu0 0.0
      %545 = vmatprep.subr.mxu0 0.0
      %546 = vmatpush1.msra.mxu0 0.0
      %547 = vmatprep.subr.mxu0 0.0
      %548 = vmatpush1.msra.mxu0 0.0
      %549 = vmatprep.subr.mxu0 0.0
      %550 = vmatpush1.msra.mxu0 0.0
      %551 = vmatprep.subr.mxu0 0.0
      %552 = vmatpush1.msra.mxu0 0.0
      %553 = vmatprep.subr.mxu0 0.0
      %554 = vmatpush1.msra.mxu0 0.0
      %555 = vmatprep.subr.mxu0 0.0
      %556 = vmatpush1.msra.mxu0 0.0
      %557 = vmatprep.subr.mxu0 0.0
      %558 = vmatpush1.msra.mxu0 0.0
      %559 = vmatprep.subr.mxu0 0.0
      %560 = vmatpush1.msra.mxu0 0.0
      %561 = vmatprep.subr.mxu0 0.0
      %562 = vmatpush1.msra.mxu0 0.0
      %563 = vmatprep.subr.mxu0 0.0
      %564 = vmatpush1.msra.mxu0 0.0
      %565 = vmatprep.subr.mxu0 0.0
      %566 = vmatpush1.msra.mxu0 0.0
      %567 = vmatprep.subr.mxu0 0.0
      %568 = vmatpush1.msra.mxu0 0.0
      %569 = vmatprep.subr.mxu0 0.0
      %570 = vmatpush1.msra.mxu0 0.0
      %571 = vmatprep.subr.mxu0 0.0
      %572 = vmatpush1.msra.mxu0 0.0
      %573 = vmatprep.mubr.f32.mxu0 0.0
      %574 = vmatmul.mubr.f32.gmra.mrb[0].mxu0 %v499
      %v575 = vpop.f32.mrb[0].mxu0
      %v576 = vadd.f32 %v494, %v575
      %v577 = vpop.f32.mrb[0].mxu0
      %v578 = vadd.f32 %v494, %v577
      %579 = vmatprep.mubr.f32.mxu0 0.0
      %580 = vmatmul.mubr.f32.gmra.mrb[0].mxu0 %v501
      %v581 = vpop.f32.mrb[0].mxu0
      %v582 = vadd.f32 %v496, %v581
      %v583 = vpop.f32.mrb[0].mxu0
      %v584 = vadd.f32 %v496, %v583
      %585 = vdwg.mxu0
      %v586 = vxor.u32 %v576, 2147483648
      %v587 = vxor.u32 %v578, 2147483648
      %v588 = vxor.u32 %v582, 2147483648
      %v589 = vxor.u32 %v584, 2147483648
      %v590 = vmul.f32 %v586, 1.442695
      %v591 = vpow.pop %v590
      %v592 = vmul.f32 %v587, 1.442695
      %v593 = vpow.pop %v592
      %v594 = vmul.f32 %v588, 1.442695
      %v595 = vpow.pop %v594
      %v596 = vmul.f32 %v589, 1.442695
      %v597 = vpow.pop %v596
      %v598 = vadd.f32 %v591, 1.0
      %v599 = vadd.f32 %v593, 1.0
      %v600 = vadd.f32 %v595, 1.0
      %v601 = vadd.f32 %v597, 1.0
      %v602 = vrcp.pop %v598
      %v603 = vmul.f32 1.0, %v602
      %v604 = vrcp.pop %v599
      %v605 = vmul.f32 1.0, %v604
      %v606 = vrcp.pop %v600
      %v607 = vmul.f32 1.0, %v606
      %v608 = vrcp.pop %v601
      %v609 = vmul.f32 1.0, %v608
      %610 = vxpose.xlu0.b32.start [1/16] %v603, 128
      %611 = vxpose.xlu0.b32.cont [2/16] %v607, 128
      %612 = vxpose.xlu0.b32.cont [3/16] 0.0, 128
      %613 = vxpose.xlu0.b32.cont [4/16] 0.0, 128
      %614 = vxpose.xlu0.b32.cont [5/16] 0.0, 128
      %615 = vxpose.xlu0.b32.cont [6/16] 0.0, 128
      %616 = vxpose.xlu0.b32.cont [7/16] 0.0, 128
      %617 = vxpose.xlu0.b32.cont [8/16] 0.0, 128
      %618 = vxpose.xlu0.b32.cont [9/16] 0.0, 128
      %619 = vxpose.xlu0.b32.cont [10/16] 0.0, 128
      %620 = vxpose.xlu0.b32.cont [11/16] 0.0, 128
      %621 = vxpose.xlu0.b32.cont [12/16] 0.0, 128
      %622 = vxpose.xlu0.b32.cont [13/16] 0.0, 128
      %623 = vxpose.xlu0.b32.cont [14/16] 0.0, 128
      %624 = vxpose.xlu0.b32.cont [15/16] 0.0, 128
      %625 = vxpose.xlu0.b32.end [16/16] 0.0, 128
      %v626 = vpop.trf.xlu0
      %v627 = vpop.trf.xlu0
      %v628 = vpop.trf.xlu0
      %v629 = vpop.trf.xlu0
      %v630 = vpop.trf.xlu0
      %v631 = vpop.trf.xlu0
      %v632 = vpop.trf.xlu0
      %v633 = vpop.trf.xlu0
      %v634 = vpop.trf.xlu0
      %v635 = vpop.trf.xlu0
      %v636 = vpop.trf.xlu0
      %v637 = vpop.trf.xlu0
      %v638 = vpop.trf.xlu0
      %v639 = vpop.trf.xlu0
      %v640 = vpop.trf.xlu0
      %v641 = vpop.trf.xlu0
      %642 = vxpose.xlu0.b32.start [1/16] %v605, 128
      %643 = vxpose.xlu0.b32.cont [2/16] %v609, 128
      %644 = vxpose.xlu0.b32.cont [3/16] 0.0, 128
      %645 = vxpose.xlu0.b32.cont [4/16] 0.0, 128
      %646 = vxpose.xlu0.b32.cont [5/16] 0.0, 128
      %647 = vxpose.xlu0.b32.cont [6/16] 0.0, 128
      %648 = vxpose.xlu0.b32.cont [7/16] 0.0, 128
      %649 = vxpose.xlu0.b32.cont [8/16] 0.0, 128
      %650 = vxpose.xlu0.b32.cont [9/16] 0.0, 128
      %651 = vxpose.xlu0.b32.cont [10/16] 0.0, 128
      %652 = vxpose.xlu0.b32.cont [11/16] 0.0, 128
      %653 = vxpose.xlu0.b32.cont [12/16] 0.0, 128
      %654 = vxpose.xlu0.b32.cont [13/16] 0.0, 128
      %655 = vxpose.xlu0.b32.cont [14/16] 0.0, 128
      %656 = vxpose.xlu0.b32.cont [15/16] 0.0, 128
      %657 = vxpose.xlu0.b32.end [16/16] 0.0, 128
      %v658 = vpop.trf.xlu0
      %v659 = vpop.trf.xlu0
      %v660 = vpop.trf.xlu0
      %v661 = vpop.trf.xlu0
      %v662 = vpop.trf.xlu0
      %v663 = vpop.trf.xlu0
      %v664 = vpop.trf.xlu0
      %v665 = vpop.trf.xlu0
      %v666 = vpop.trf.xlu0
      %v667 = vpop.trf.xlu0
      %v668 = vpop.trf.xlu0
      %v669 = vpop.trf.xlu0
      %v670 = vpop.trf.xlu0
      %v671 = vpop.trf.xlu0
      %v672 = vpop.trf.xlu0
      %v673 = vpop.trf.xlu0
      %vm674 = vcmask 130048
      %675 = vst.msk [vmem:[%s145] sm:$0xff] %vm674, %v626
      %676 = vst.msk [vmem:[%s145 + $0x8] sm:$0xff] %vm674, %v627
      %677 = vst.msk [vmem:[%s145 + $0x10] sm:$0xff] %vm674, %v628
      %678 = vst.msk [vmem:[%s145 + $0x18] sm:$0xff] %vm674, %v629
      %679 = vst.msk [vmem:[%s145 + $0x20] sm:$0xff] %vm674, %v630
      %680 = vst.msk [vmem:[%s145 + $0x28] sm:$0xff] %vm674, %v631
      %681 = vst.msk [vmem:[%s145 + $0x30] sm:$0xff] %vm674, %v632
      %682 = vst.msk [vmem:[%s145 + $0x38] sm:$0xff] %vm674, %v633
      %683 = vst.msk [vmem:[%s145 + $0x40] sm:$0xff] %vm674, %v634
      %684 = vst.msk [vmem:[%s145 + $0x48] sm:$0xff] %vm674, %v635
      %685 = vst.msk [vmem:[%s145 + $0x50] sm:$0xff] %vm674, %v636
      %686 = vst.msk [vmem:[%s145 + $0x58] sm:$0xff] %vm674, %v637
      %687 = vst.msk [vmem:[%s145 + $0x60] sm:$0xff] %vm674, %v638
      %688 = vst.msk [vmem:[%s145 + $0x68] sm:$0xff] %vm674, %v639
      %689 = vst.msk [vmem:[%s145 + $0x70] sm:$0xff] %vm674, %v640
      %690 = vst.msk [vmem:[%s145 + $0x78] sm:$0xff] %vm674, %v641
      %691 = vst.msk [vmem:[%s145 + $0x80] sm:$0xff] %vm674, %v658
      %692 = vst.msk [vmem:[%s145 + $0x88] sm:$0xff] %vm674, %v659
      %693 = vst.msk [vmem:[%s145 + $0x90] sm:$0xff] %vm674, %v660
      %694 = vst.msk [vmem:[%s145 + $0x98] sm:$0xff] %vm674, %v661
      %695 = vst.msk [vmem:[%s145 + $0xa0] sm:$0xff] %vm674, %v662
      %696 = vst.msk [vmem:[%s145 + $0xa8] sm:$0xff] %vm674, %v663
      %697 = vst.msk [vmem:[%s145 + $0xb0] sm:$0xff] %vm674, %v664
      %698 = vst.msk [vmem:[%s145 + $0xb8] sm:$0xff] %vm674, %v665
      %699 = vst.msk [vmem:[%s145 + $0xc0] sm:$0xff] %vm674, %v666
      %700 = vst.msk [vmem:[%s145 + $0xc8] sm:$0xff] %vm674, %v667
      %701 = vst.msk [vmem:[%s145 + $0xd0] sm:$0xff] %vm674, %v668
      %702 = vst.msk [vmem:[%s145 + $0xd8] sm:$0xff] %vm674, %v669
      %703 = vst.msk [vmem:[%s145 + $0xe0] sm:$0xff] %vm674, %v670
      %704 = vst.msk [vmem:[%s145 + $0xe8] sm:$0xff] %vm674, %v671
      %705 = vst.msk [vmem:[%s145 + $0xf0] sm:$0xff] %vm674, %v672
      %706 = vst.msk [vmem:[%s145 + $0xf8] sm:$0xff] %vm674, %v673
      %s707 = smul.u32 32, %s13
      %p708 = scmp.lt.s32.totalorder %s707, 63
      %s709 = scalar_select %p708, %s707, 63
      %s710 = smul.addr %s709, 8
      %s711 = scalar_lea.vmem %s2, %s710
      // Predicated region
      $region29: #{linear_generator_sigmoid.1} parent=27 // pred_check
        %p712 = pneg %p78
      $region30: #{linear_generator_sigmoid.1} parent=27 // pred_check_branch
        %714 = sbr.rel (%p712) target = $region32
      $region31: #{linear_generator_sigmoid.1} parent=27 // pred_region
        %s715 = smul.u32 32, %s13
      $region32: #{linear_generator_sigmoid.1} parent=27 // pred_fallthru
        _
    $region28: #{linear_generator_sigmoid.1} parent=5 // pred_fallthru
      _
    %p716 = scmp.le.s32.totalorder 2, %s8
    // Predicated region
    $region33: #{linear_generator_sigmoid.1} parent=5 // pred_check
      %p717 = pneg %p716
    $region34: #{linear_generator_sigmoid.1} parent=5 // pred_check_branch
      %719 = sbr.rel (%p717) target = $region36
    $region35: #{linear_generator_sigmoid.1} parent=5 // pred_region
      %s720 = ssub.s32 %s8, 2
      // Predicated region
      $region37: #{linear_generator_sigmoid.1} parent=35 // pred_check
        %p721 = pneg %p84
      $region38: #{linear_generator_sigmoid.1} parent=35 // pred_check_branch
        %723 = sbr.rel (%p721) target = $region40
      $region39: #{linear_generator_sigmoid.1} parent=35 // pred_region
        %s724 = smul.u32 32, %s14
        %p725 = scmp.lt.s32.totalorder %s724, 63
        %s726 = scalar_select %p725, %s724, 63
        %s727 = smul.addr %s726, 8
        %s728 = scalar_lea.vmem %s2, %s727
      $region40: #{linear_generator_sigmoid.1} parent=35 // pred_fallthru
        _
    $region36: #{linear_generator_sigmoid.1} parent=5 // pred_fallthru
      _
  $region6: #{linear_generator_sigmoid.1} parent=0 // loop_footer
    %s12 = sadd.s32 1, %s8
  $region7: #{linear_generator_sigmoid.1} parent=0 // loop_footer_branch
    %7 = sbr.rel target = $region3
  $region8: #{linear_generator_sigmoid.1} parent=0 // loop_exit
    _

</llo_original>
